<compile_context>
chip_gen: v7x
topology: tpu7x:2x2x1
jax: 0.10.0
libtpu: 0.0.40
codegen_flags: <defaults>
</compile_context>

<pallas_src>
import functools

import jax
import jax.numpy as jnp
from jax.experimental import pallas as pl
from jax.experimental.pallas import tpu as pltpu

BN_EPS = 1e-5
_TN_MAX = 1024                         # batch tile (rows)
_RESIDENT_Y_BYTES_MAX = 16 * 1024 * 1024   # VMEM budget for the resident-y slab (all chips)
_VMEM_LIMIT = 32 * 1024 * 1024


def _round_up(x, m):
    return ((x + m - 1) // m) * m


def _fused_kernel(x_ref, w_ref, g_ref, b_ref, o_ref,
                  sum_scr, sumsq_scr, *maybe_y_scr,
                  tn, inv_n, resident_y):
    """grid = (2, n_tiles). pass 0: matmul + stats. pass 1: BN fold + normalize + ReLU."""
    p = pl.program_id(0)   # 0: matmul + stats, 1: normalize
    i = pl.program_id(1)   # batch tile

    def matmul():
        # Linear (bias dropped: exactly cancelled by BN mean subtraction). bf16 MXU, f32 acc.
        return jnp.dot(x_ref[...].astype(jnp.bfloat16), w_ref[...],
                       preferred_element_type=jnp.float32)

    @pl.when(p == 0)
    def _():
        @pl.when(i == 0)
        def _():
            sum_scr[...] = jnp.zeros_like(sum_scr)
            sumsq_scr[...] = jnp.zeros_like(sumsq_scr)

        y = matmul()
        if resident_y:
            row0 = pl.multiple_of(i * tn, 8)
            maybe_y_scr[0][pl.ds(row0, tn), :] = y
        sum_scr[...] += jnp.sum(y, axis=0, keepdims=True)
        sumsq_scr[...] += jnp.sum(y * y, axis=0, keepdims=True)

    @pl.when(p == 1)
    def _():
        # Fold BN into one per-feature scale/shift (tiny (1, dout) math; rsqrt -> EUP).
        mean = sum_scr[...] * inv_n
        var = jnp.maximum(sumsq_scr[...] * inv_n - mean * mean, 0.0)  # clamp vs cancellation
        scale = g_ref[...] * jax.lax.rsqrt(var + BN_EPS)
        shift = b_ref[...] - mean * scale

        if resident_y:
            row0 = pl.multiple_of(i * tn, 8)
            y = maybe_y_scr[0][pl.ds(row0, tn), :]
        else:
            y = matmul()   # recompute x@W instead of round-tripping f32 y through HBM
        o_ref[...] = jnp.maximum(y * scale + shift, 0.0)


@jax.jit
def d_topo_projector(x, w_t, b, gamma, beta):
    """x: (N, in_dim) f32; w_t: (in_dim, out_dim); b/gamma/beta: (out_dim,).

    Returns (N, out_dim, 1, 1) f32, matching the PyTorch forward (training-mode BN).
    """
    del b  # linear bias is exactly cancelled by training-mode BN mean subtraction

    n, din = x.shape
    dout = w_t.shape[1]

    tn = min(_TN_MAX, _round_up(n, 8))
    n_p = _round_up(n, tn)
    nt = n_p // tn

    # Only pad the batch tail (zeros contribute nothing to sum/sumsq); no feature padding,
    # no separate cast pass over x (cast to bf16 happens inside the kernel).
    if n_p != n:
        x = jnp.pad(x, ((0, n_p - n), (0, 0)))

    w_bf = w_t.astype(jnp.bfloat16)
    g2 = gamma.astype(jnp.float32).reshape(1, dout)
    b2 = beta.astype(jnp.float32).reshape(1, dout)

    # Keep y resident in VMEM across passes if the (lane-padded) slab fits a conservative
    # budget (safe even on v7x's 64 MiB VMEM); otherwise recompute x@W in pass 1.
    y_scratch_bytes = n_p * _round_up(dout, 128) * 4
    resident_y = y_scratch_bytes <= _RESIDENT_Y_BYTES_MAX

    if resident_y:
        # Stream x only during pass 0; freeze its block index during pass 1 (no re-DMA).
        x_index_map = lambda p, i: (i * (1 - p) + (nt - 1) * p, 0)
    else:
        x_index_map = lambda p, i: (i, 0)

    scratch_shapes = [
        pltpu.VMEM((1, dout), jnp.float32),   # per-feature sum
        pltpu.VMEM((1, dout), jnp.float32),   # per-feature sum of squares
    ]
    if resident_y:
        scratch_shapes.append(pltpu.VMEM((n_p, dout), jnp.float32))

    kernel = functools.partial(_fused_kernel, tn=tn, inv_n=1.0 / n, resident_y=resident_y)

    out = pl.pallas_call(
        kernel,
        out_shape=jax.ShapeDtypeStruct((n_p, dout), jnp.float32),
        grid=(2, nt),
        in_specs=[
            pl.BlockSpec((tn, din), x_index_map),             # x, f32, cast in-kernel
            pl.BlockSpec((din, dout), lambda p, i: (0, 0)),   # weights resident
            pl.BlockSpec((1, dout), lambda p, i: (0, 0)),     # gamma resident
            pl.BlockSpec((1, dout), lambda p, i: (0, 0)),     # beta resident
        ],
        # Output block frozen at 0 during pass 0 (never written there, never flushed);
        # written once per tile during pass 1.
        out_specs=pl.BlockSpec((tn, dout), lambda p, i: (i * p, 0)),
        scratch_shapes=scratch_shapes,
        compiler_params=pltpu.CompilerParams(
            dimension_semantics=("arbitrary", "arbitrary"),
            vmem_limit_bytes=_VMEM_LIMIT,
        ),
    )(x, w_bf, g2, b2)

    if n_p != n:
        out = out[:n]
    # Trailing (1, 1) dims are metadata-only (x.view(*x.shape, 1, 1)).
    return out.reshape(n, dout, 1, 1)


if __name__ == "__main__":
    # Small shapes consistent with the module: in_dim=64 (default), out_dim=32, batch=8.
    N, IN_DIM, OUT_DIM = 8, 64, 32

    key = jax.random.PRNGKey(0)
    k_x, k_w, k_b = jax.random.split(key, 3)

    x = jax.random.normal(k_x, (N, IN_DIM), dtype=jnp.float32)

    # Deterministic synthetic parameters; Linear weight stored transposed (in_dim, out_dim).
    bound = 1.0 / jnp.sqrt(IN_DIM)
    w_t = jax.random.uniform(k_w, (IN_DIM, OUT_DIM), jnp.float32, -bound, bound)
    b = jax.random.uniform(k_b, (OUT_DIM,), jnp.float32, -bound, bound)
    gamma = jnp.ones((OUT_DIM,), jnp.float32)   # BatchNorm1d default weight
    beta = jnp.zeros((OUT_DIM,), jnp.float32)   # BatchNorm1d default bias

    out = d_topo_projector(x, w_t, b, gamma, beta)
    jax.block_until_ready(out)
    assert out.shape == (N, OUT_DIM, 1, 1)

    def ref_forward(xx, ww):
        y = xx @ ww + b                     # bias included: verifies the BN-cancellation claim
        mean = jnp.mean(y, axis=0, keepdims=True)
        var = jnp.mean((y - mean) ** 2, axis=0, keepdims=True)   # biased (training mode)
        return jnp.maximum((y - mean) / jnp.sqrt(var + BN_EPS) * gamma + beta,
                           0.0).reshape(N, OUT_DIM, 1, 1)

    # Check against a bf16-matched reference (same MXU input precision as the kernel).
    ref_bf16 = ref_forward(x.astype(jnp.bfloat16).astype(jnp.float32),
                           w_t.astype(jnp.bfloat16).astype(jnp.float32))
    assert jnp.allclose(out, ref_bf16, atol=2e-3, rtol=2e-3)

    # Loose check against the exact f32 PyTorch-semantics reference.
    ref_f32 = ref_forward(x, w_t)
    assert jnp.allclose(out, ref_f32, atol=5e-2, rtol=5e-2)

    print("KERNEL_OK")
</pallas_src>

<mosaic_0001>
module attributes {stable_mosaic.version = 11 : i64} {
  func.func @_fused_kernel(%arg0: i32, %arg1: i32, %arg2: memref<8x64xf32, #tpu.memory_space<vmem>>, %arg3: memref<64x32xbf16, #tpu.memory_space<vmem>>, %arg4: memref<1x32xf32, #tpu.memory_space<vmem>>, %arg5: memref<1x32xf32, #tpu.memory_space<vmem>>, %arg6: memref<8x32xf32, #tpu.memory_space<vmem>>, %arg7: memref<1x32xf32, #tpu.memory_space<vmem>>, %arg8: memref<1x32xf32, #tpu.memory_space<vmem>>, %arg9: memref<8x32xf32, #tpu.memory_space<vmem>>) attributes {dimension_semantics = [#tpu.dimension_semantics<arbitrary>, #tpu.dimension_semantics<arbitrary>], iteration_bounds = array<i64: 2, 1>, scalar_prefetch = 0 : i64, scratch_operands = 3 : i64, tpu.core_type = #tpu.core_type<tc>, window_params = [{transform_indices = @transform_0, window_bounds = array<i64: 8, 64>}, {pipeline_mode = #tpu.pipeline_mode<synchronous>, transform_indices = @transform_1, window_bounds = array<i64: 64, 32>}, {pipeline_mode = #tpu.pipeline_mode<synchronous>, transform_indices = @transform_2, window_bounds = array<i64: 1, 32>}, {pipeline_mode = #tpu.pipeline_mode<synchronous>, transform_indices = @transform_3, window_bounds = array<i64: 1, 32>}, {transform_indices = @transform_4, window_bounds = array<i64: 8, 32>}]} {
    %c0_i32 = arith.constant 0 : i32
    %0 = arith.cmpi eq, %arg0, %c0_i32 : i32
    %1 = arith.extui %0 : i1 to i32
    %c0_i32_0 = arith.constant 0 : i32
    %2 = arith.cmpi ne, %1, %c0_i32_0 : i32
    scf.if %2 {
      %c0_i32_2 = arith.constant 0 : i32
      %6 = arith.cmpi eq, %arg1, %c0_i32_2 : i32
      %7 = arith.extui %6 : i1 to i32
      %c0_i32_3 = arith.constant 0 : i32
      %8 = arith.cmpi ne, %7, %c0_i32_3 : i32
      scf.if %8 {
        %cst_18 = arith.constant 0.000000e+00 : f32
        %28 = vector.broadcast %cst_18 : f32 to vector<1x32xf32>
        %c0_19 = arith.constant 0 : index
        %c0_20 = arith.constant 0 : index
        %29 = vector.load %arg7[%c0_19, %c0_20] : memref<1x32xf32, #tpu.memory_space<vmem>>, vector<1x32xf32>
        tpu.vector_store %arg7[%c0_19, %c0_20], %28 {strides = array<i32>} : memref<1x32xf32, #tpu.memory_space<vmem>>, vector<1x32xf32>,
        %cst_21 = arith.constant 0.000000e+00 : f32
        %30 = vector.broadcast %cst_21 : f32 to vector<1x32xf32>
        %c0_22 = arith.constant 0 : index
        %c0_23 = arith.constant 0 : index
        %31 = vector.load %arg8[%c0_22, %c0_23] : memref<1x32xf32, #tpu.memory_space<vmem>>, vector<1x32xf32>
        tpu.vector_store %arg8[%c0_22, %c0_23], %30 {strides = array<i32>} : memref<1x32xf32, #tpu.memory_space<vmem>>, vector<1x32xf32>,
      } else {
      }
      %c0 = arith.constant 0 : index
      %c0_4 = arith.constant 0 : index
      %9 = vector.load %arg2[%c0, %c0_4] : memref<8x64xf32, #tpu.memory_space<vmem>>, vector<8x64xf32>
      %10 = arith.truncf %9 : vector<8x64xf32> to vector<8x64xbf16>
      %c0_5 = arith.constant 0 : index
      %c0_6 = arith.constant 0 : index
      %11 = vector.load %arg3[%c0_5, %c0_6] : memref<64x32xbf16, #tpu.memory_space<vmem>>, vector<64x32xbf16>
      %cst = arith.constant dense<0.000000e+00> : vector<8x32xf32>
      %12 = tpu.matmul %10, %11, %cst {dimension_numbers = #tpu.dot_dimension_numbers<[1], [0], [0], [1], [0, 0, 1, 1], [], []>} : vector<8x64xbf16>, vector<64x32xbf16>, vector<8x32xf32> -> vector<8x32xf32>
      %c8_i32 = arith.constant 8 : i32
      %13 = arith.muli %arg1, %c8_i32 : i32
      %14 = tpu.assume_multiple %13, 8 : i32
      %15 = arith.index_cast %14 : i32 to index
      %c0_7 = arith.constant 0 : index
      %16 = vector.load %arg9[%15, %c0_7] : memref<8x32xf32, #tpu.memory_space<vmem>>, vector<8x32xf32>
      tpu.vector_store %arg9[%15, %c0_7], %12 {strides = array<i32>} : memref<8x32xf32, #tpu.memory_space<vmem>>, vector<8x32xf32>,
      %c0_8 = arith.constant 0 : index
      %c0_9 = arith.constant 0 : index
      %17 = vector.load %arg7[%c0_8, %c0_9] : memref<1x32xf32, #tpu.memory_space<vmem>>, vector<1x32xf32>
      %cst_10 = arith.constant dense<0.000000e+00> : vector<32xf32>
      %18 = vector.multi_reduction <add>, %12, %cst_10 [0] : vector<8x32xf32> to vector<32xf32>
      %19 = vector.shape_cast %18 : vector<32xf32> to vector<1x32xf32>
      %20 = arith.addf %17, %19 : vector<1x32xf32>
      %c0_11 = arith.constant 0 : index
      %c0_12 = arith.constant 0 : index
      %21 = vector.load %arg7[%c0_11, %c0_12] : memref<1x32xf32, #tpu.memory_space<vmem>>, vector<1x32xf32>
      tpu.vector_store %arg7[%c0_11, %c0_12], %20 {strides = array<i32>} : memref<1x32xf32, #tpu.memory_space<vmem>>, vector<1x32xf32>,
      %c0_13 = arith.constant 0 : index
      %c0_14 = arith.constant 0 : index
      %22 = vector.load %arg8[%c0_13, %c0_14] : memref<1x32xf32, #tpu.memory_space<vmem>>, vector<1x32xf32>
      %23 = arith.mulf %12, %12 : vector<8x32xf32>
      %cst_15 = arith.constant dense<0.000000e+00> : vector<32xf32>
      %24 = vector.multi_reduction <add>, %23, %cst_15 [0] : vector<8x32xf32> to vector<32xf32>
      %25 = vector.shape_cast %24 : vector<32xf32> to vector<1x32xf32>
      %26 = arith.addf %22, %25 : vector<1x32xf32>
      %c0_16 = arith.constant 0 : index
      %c0_17 = arith.constant 0 : index
      %27 = vector.load %arg8[%c0_16, %c0_17] : memref<1x32xf32, #tpu.memory_space<vmem>>, vector<1x32xf32>
      tpu.vector_store %arg8[%c0_16, %c0_17], %26 {strides = array<i32>} : memref<1x32xf32, #tpu.memory_space<vmem>>, vector<1x32xf32>,
    } else {
    }
    %c1_i32 = arith.constant 1 : i32
    %3 = arith.cmpi eq, %arg0, %c1_i32 : i32
    %4 = arith.extui %3 : i1 to i32
    %c0_i32_1 = arith.constant 0 : i32
    %5 = arith.cmpi ne, %4, %c0_i32_1 : i32
    scf.if %5 {
      %c0 = arith.constant 0 : index
      %c0_2 = arith.constant 0 : index
      %6 = vector.load %arg7[%c0, %c0_2] : memref<1x32xf32, #tpu.memory_space<vmem>>, vector<1x32xf32>
      %cst = arith.constant 1.250000e-01 : f32
      %7 = vector.broadcast %cst : f32 to vector<1x32xf32>
      %8 = arith.mulf %6, %7 : vector<1x32xf32>
      %c0_3 = arith.constant 0 : index
      %c0_4 = arith.constant 0 : index
      %9 = vector.load %arg8[%c0_3, %c0_4] : memref<1x32xf32, #tpu.memory_space<vmem>>, vector<1x32xf32>
      %cst_5 = arith.constant 1.250000e-01 : f32
      %10 = vector.broadcast %cst_5 : f32 to vector<1x32xf32>
      %11 = arith.mulf %9, %10 : vector<1x32xf32>
      %12 = arith.mulf %8, %8 : vector<1x32xf32>
      %13 = arith.subf %11, %12 : vector<1x32xf32>
      %cst_6 = arith.constant 0.000000e+00 : f32
      %14 = vector.broadcast %cst_6 : f32 to vector<1x32xf32>
      %15 = arith.maximumf %13, %14 : vector<1x32xf32>
      %c0_7 = arith.constant 0 : index
      %c0_8 = arith.constant 0 : index
      %16 = vector.load %arg4[%c0_7, %c0_8] : memref<1x32xf32, #tpu.memory_space<vmem>>, vector<1x32xf32>
      %cst_9 = arith.constant 9.99999974E-6 : f32
      %17 = vector.broadcast %cst_9 : f32 to vector<1x32xf32>
      %18 = arith.addf %15, %17 : vector<1x32xf32>
      %19 = math.rsqrt %18 : vector<1x32xf32>
      %20 = arith.mulf %16, %19 : vector<1x32xf32>
      %c0_10 = arith.constant 0 : index
      %c0_11 = arith.constant 0 : index
      %21 = vector.load %arg5[%c0_10, %c0_11] : memref<1x32xf32, #tpu.memory_space<vmem>>, vector<1x32xf32>
      %22 = arith.mulf %8, %20 : vector<1x32xf32>
      %23 = arith.subf %21, %22 : vector<1x32xf32>
      %c8_i32 = arith.constant 8 : i32
      %24 = arith.muli %arg1, %c8_i32 : i32
      %25 = tpu.assume_multiple %24, 8 : i32
      %26 = arith.index_cast %25 : i32 to index
      %c0_12 = arith.constant 0 : index
      %27 = vector.load %arg9[%26, %c0_12] : memref<8x32xf32, #tpu.memory_space<vmem>>, vector<8x32xf32>
      %28 = vector.broadcast %20 : vector<1x32xf32> to vector<8x32xf32>
      %29 = arith.mulf %27, %28 : vector<8x32xf32>
      %30 = vector.broadcast %23 : vector<1x32xf32> to vector<8x32xf32>
      %31 = arith.addf %29, %30 : vector<8x32xf32>
      %cst_13 = arith.constant 0.000000e+00 : f32
      %32 = vector.broadcast %cst_13 : f32 to vector<8x32xf32>
      %33 = arith.maximumf %31, %32 : vector<8x32xf32>
      %c0_14 = arith.constant 0 : index
      %c0_15 = arith.constant 0 : index
      %34 = vector.load %arg6[%c0_14, %c0_15] : memref<8x32xf32, #tpu.memory_space<vmem>>, vector<8x32xf32>
      tpu.vector_store %arg6[%c0_14, %c0_15], %33 {strides = array<i32>} : memref<8x32xf32, #tpu.memory_space<vmem>>, vector<8x32xf32>,
    } else {
    }
    return
  }
  func.func @transform_0(%arg0: i32, %arg1: i32) -> (i32, i32) {
    %c1_i32 = arith.constant 1 : i32
    %0 = arith.subi %c1_i32, %arg0 : i32
    %1 = arith.muli %arg1, %0 : i32
    %c0_i32 = arith.constant 0 : i32
    %2 = arith.muli %c0_i32, %arg0 : i32
    %3 = arith.addi %1, %2 : i32
    %c0_i32_0 = arith.constant 0 : i32
    %c0_i32_1 = arith.constant 0 : i32
    return %3, %c0_i32_0 : i32, i32
  }
  func.func @transform_1(%arg0: i32, %arg1: i32) -> (i32, i32) {
    %c0_i32 = arith.constant 0 : i32
    %c0_i32_0 = arith.constant 0 : i32
    %c0_i32_1 = arith.constant 0 : i32
    return %c0_i32, %c0_i32_0 : i32, i32
  }
  func.func @transform_2(%arg0: i32, %arg1: i32) -> (i32, i32) {
    %c0_i32 = arith.constant 0 : i32
    %c0_i32_0 = arith.constant 0 : i32
    %c0_i32_1 = arith.constant 0 : i32
    return %c0_i32, %c0_i32_0 : i32, i32
  }
  func.func @transform_3(%arg0: i32, %arg1: i32) -> (i32, i32) {
    %c0_i32 = arith.constant 0 : i32
    %c0_i32_0 = arith.constant 0 : i32
    %c0_i32_1 = arith.constant 0 : i32
    return %c0_i32, %c0_i32_0 : i32, i32
  }
  func.func @transform_4(%arg0: i32, %arg1: i32) -> (i32, i32) {
    %0 = arith.muli %arg1, %arg0 : i32
    %c0_i32 = arith.constant 0 : i32
    %c0_i32_0 = arith.constant 0 : i32
    return %0, %c0_i32 : i32, i32
  }
}

</mosaic_0001>

<llo_original>
// kernel: d_topo_projector.1
$region0: #{d_topo_projector.1}
  #allocation0 [shape = 'u32[]', space=smem, size = 0x4, offset = 0x4, fixed_abs, tag = 'smem constant byte address 0x4 - core index']
  #allocation1 [shape = 'u32[144,128]{1,0:T(1,128)}', space=vmem, size = 0x12000, scoped, tag = 'internal scratch']
  #allocation2 [shape = 'f32[1,32]{1,0:T(1,128)}', space=vmem, size = 0x200, scoped, tag = 'scratch operand']
  #allocation3 [shape = 'f32[1,32]{1,0:T(1,128)}', space=vmem, size = 0x200, scoped, tag = 'scratch operand']
  #allocation4 [shape = 'f32[8,32]{1,0:T(8,128)}', space=vmem, size = 0x1000, scoped, tag = 'scratch operand']
  %s0 = inlined_call_operand.vmem [shape: f32[8,64], index: 0, kind: input, shape index: {}]
  %s1 = inlined_call_operand.vmem [shape: bf16[64,32], index: 1, kind: input, shape index: {}]
  %s2 = inlined_call_operand.vmem [shape: f32[1,32], index: 2, kind: input, shape index: {}]
  %s3 = inlined_call_operand.vmem [shape: f32[1,32], index: 3, kind: input, shape index: {}]
  %s4 = inlined_call_operand.hbm [shape: f32[8,32], index: 4, kind: output, shape index: {}]
  %s5 = sld [smem:[#allocation0]]
  $region61: #{d_topo_projector.1} parent=0
    _
  %s7 = ssub.s32 1, %s5
  %s8 = scalar_select 0, %s7, %s5
  $region1: #{d_topo_projector.1} parent=0
    #allocation5 [shape = 'u8[8192]{0}', space=vmem, size = 0x2000, scoped, tag = 'output window, operand 0']
    #allocation6 [shape = 's32[2]{0}', space=sflag, size = 0x8, scoped, tag = 'scoped memory for d_topo_projector.1']
    %9 = vsyncpa [#allocation6], 0
    %s10 = scalar_lea.sflag [#allocation6], 1
    %11 = vsyncpa %s10, 0
    loop: start=0, step=1, limit=4
    $region2: #{d_topo_projector.1} parent=1 // loop_pre_header
      _
    $region3: #{d_topo_projector.1} parent=1 // loop_header
      %s13 = sphi 0, %s17
      %p14 = scmp.ge.s32.totalorder %s13, 4
      %s20 = sphi 0, %s32
      %s21 = sphi 0, %s28
      %s22 = sphi 0, %s20
      %s23 = sphi 0, %s21
      %s24 = sphi 0, %s22
      %s25 = sphi 0, %s23
      %s39 = sphi 0, %s41
      %s42 = sphi 0, %s39
      %s43 = sphi 0, %s42
      %s59 = sphi 0, %s43
      %s63 = sphi 0, %s63
      %s65 = sphi 0, %s63
      %s66 = sphi 0, %s65
      %s80 = sphi 0, %s66
      %s84 = sphi 0, %s84
      %s86 = sphi 0, %s84
      %s87 = sphi 0, %s86
      %s101 = sphi 0, %s87
      %s105 = sphi 0, %s105
      %s107 = sphi 0, %s105
      %s108 = sphi 0, %s107
      %s122 = sphi 0, %s108
      %s130 = sphi 0, %s132
      %s133 = sphi 0, %s130
      %s134 = sphi 0, %s133
      %s150 = sphi 0, %s134
    $region4: #{d_topo_projector.1} parent=1 // loop_header_branch
      %16 = sbr.rel (%p14) target = $region8
    $region5: #{d_topo_projector.1} parent=1 // loop_body
      %s18 = ssub.s32 %s13, 1
      %s19 = ssub.s32 %s13, 2
      %s26 = sadd.s32 1, %s21
      %p27 = scmp.ge.s32.totalorder %s26, 1
      %s28 = scalar_select %p27, 0, %s26
      %s29 = sadd.s32 1, %s20
      %s30 = scalar_select %p27, %s29, %s20
      %p31 = scmp.ge.s32.totalorder %s30, 2
      %s32 = scalar_select %p31, 0, %s30
      %s33 = ssub.s32 1, %s20
      %s34 = smul.u32 %s21, %s33
      %s35 = ssub.s32 1, %s32
      %s36 = smul.u32 %s28, %s35
      %s37 = ssub.s32 %s34, %s36
      %p38 = scmp.eq.s32.totalorder %s37, 0
      %s40 = sadd.s32 %s39, 1
      %s41 = scalar_select %p38, %s39, %s40
      %p44 = pneg %p38
      %p45 = scmp.eq.s32.totalorder %s13, 1
      %p46 = por %p44, %p45
      %p47 = scmp.ne.s32.totalorder %s39, %s42
      %p48 = scmp.eq.s32.totalorder %s13, 0
      %p49 = por %p47, %p48
      %p50 = scmp.ne.s32.totalorder %s39, %s42
      %p51 = scmp.eq.s32.totalorder %s18, 1
      %p52 = por %p50, %p51
      %p53 = scmp.ne.s32.totalorder %s42, %s43
      %p54 = scmp.eq.s32.totalorder %s18, 0
      %p55 = por %p53, %p54
      %p56 = scmp.ne.s32.totalorder %s42, %s43
      %p57 = scmp.eq.s32.totalorder %s19, 1
      %p58 = por %p56, %p57
      %p60 = scmp.ne.s32.totalorder %s43, %s59
      %p61 = scmp.eq.s32.totalorder %s19, 0
      %p62 = por %p60, %p61
      %s64 = sadd.s32 %s63, 1
      %p67 = scmp.eq.s32.totalorder %s13, 1
      %p68 = scmp.ne.s32.totalorder %s63, %s65
      %p69 = scmp.eq.s32.totalorder %s13, 0
      %p70 = por %p68, %p69
      %p71 = scmp.ne.s32.totalorder %s63, %s65
      %p72 = scmp.eq.s32.totalorder %s18, 1
      %p73 = por %p71, %p72
      %p74 = scmp.ne.s32.totalorder %s65, %s66
      %p75 = scmp.eq.s32.totalorder %s18, 0
      %p76 = por %p74, %p75
      %p77 = scmp.ne.s32.totalorder %s65, %s66
      %p78 = scmp.eq.s32.totalorder %s19, 1
      %p79 = por %p77, %p78
      %p81 = scmp.ne.s32.totalorder %s66, %s80
      %p82 = scmp.eq.s32.totalorder %s19, 0
      %p83 = por %p81, %p82
      %s85 = sadd.s32 %s84, 1
      %p88 = scmp.eq.s32.totalorder %s13, 1
      %p89 = scmp.ne.s32.totalorder %s84, %s86
      %p90 = scmp.eq.s32.totalorder %s13, 0
      %p91 = por %p89, %p90
      %p92 = scmp.ne.s32.totalorder %s84, %s86
      %p93 = scmp.eq.s32.totalorder %s18, 1
      %p94 = por %p92, %p93
      %p95 = scmp.ne.s32.totalorder %s86, %s87
      %p96 = scmp.eq.s32.totalorder %s18, 0
      %p97 = por %p95, %p96
      %p98 = scmp.ne.s32.totalorder %s86, %s87
      %p99 = scmp.eq.s32.totalorder %s19, 1
      %p100 = por %p98, %p99
      %p102 = scmp.ne.s32.totalorder %s87, %s101
      %p103 = scmp.eq.s32.totalorder %s19, 0
      %p104 = por %p102, %p103
      %s106 = sadd.s32 %s105, 1
      %p109 = scmp.eq.s32.totalorder %s13, 1
      %p110 = scmp.ne.s32.totalorder %s105, %s107
      %p111 = scmp.eq.s32.totalorder %s13, 0
      %p112 = por %p110, %p111
      %p113 = scmp.ne.s32.totalorder %s105, %s107
      %p114 = scmp.eq.s32.totalorder %s18, 1
      %p115 = por %p113, %p114
      %p116 = scmp.ne.s32.totalorder %s107, %s108
      %p117 = scmp.eq.s32.totalorder %s18, 0
      %p118 = por %p116, %p117
      %p119 = scmp.ne.s32.totalorder %s107, %s108
      %p120 = scmp.eq.s32.totalorder %s19, 1
      %p121 = por %p119, %p120
      %p123 = scmp.ne.s32.totalorder %s108, %s122
      %p124 = scmp.eq.s32.totalorder %s19, 0
      %p125 = por %p123, %p124
      %s126 = smul.u32 %s21, %s20
      %s127 = smul.u32 %s28, %s32
      %s128 = ssub.s32 %s126, %s127
      %p129 = scmp.eq.s32.totalorder %s128, 0
      %s131 = sadd.s32 %s130, 1
      %s132 = scalar_select %p129, %s130, %s131
      %p135 = pneg %p129
      %p136 = scmp.eq.s32.totalorder %s13, 1
      %p137 = por %p135, %p136
      %p138 = scmp.ne.s32.totalorder %s130, %s133
      %p139 = scmp.eq.s32.totalorder %s13, 0
      %p140 = por %p138, %p139
      %p141 = scmp.ne.s32.totalorder %s130, %s133
      %p142 = scmp.eq.s32.totalorder %s18, 1
      %p143 = por %p141, %p142
      %p144 = scmp.ne.s32.totalorder %s133, %s134
      %p145 = scmp.eq.s32.totalorder %s18, 0
      %p146 = por %p144, %p145
      %p147 = scmp.ne.s32.totalorder %s133, %s134
      %p148 = scmp.eq.s32.totalorder %s19, 1
      %p149 = por %p147, %p148
      %p151 = scmp.ne.s32.totalorder %s134, %s150
      %p152 = scmp.eq.s32.totalorder %s19, 0
      %p153 = por %p151, %p152
      %p154 = scmp.le.s32.totalorder 1, %s13
      %p155 = scmp.lt.s32.totalorder %s13, 3
      %p156 = pnand %p154, %p155
      %p157 = pneg %p156
      // Predicated region
      $region9: #{d_topo_projector.1} parent=5 // pred_check
        _
      $region10: #{d_topo_projector.1} parent=5 // pred_check_branch
        %159 = sbr.rel (%p156) target = $region12
      $region11: #{d_topo_projector.1} parent=5 // pred_region
        %s160 = ssub.s32 %s13, 1
        // Predicated region
        $region13: #{d_topo_projector.1} parent=11 // pred_check
          %p161 = pneg %p76
        $region14: #{d_topo_projector.1} parent=11 // pred_check_branch
          %163 = sbr.rel (%p161) target = $region16
        $region15: #{d_topo_projector.1} parent=11 // pred_region
          _
        $region16: #{d_topo_projector.1} parent=11 // pred_fallthru
          _
        // Predicated region
        $region17: #{d_topo_projector.1} parent=11 // pred_check
          %p164 = pneg %p97
        $region18: #{d_topo_projector.1} parent=11 // pred_check_branch
          %166 = sbr.rel (%p164) target = $region20
        $region19: #{d_topo_projector.1} parent=11 // pred_region
          _
        $region20: #{d_topo_projector.1} parent=11 // pred_fallthru
          _
        // Predicated region
        $region21: #{d_topo_projector.1} parent=11 // pred_check
          %p167 = pneg %p118
        $region22: #{d_topo_projector.1} parent=11 // pred_check_branch
          %169 = sbr.rel (%p167) target = $region24
        $region23: #{d_topo_projector.1} parent=11 // pred_region
          _
        $region24: #{d_topo_projector.1} parent=11 // pred_fallthru
          _
      $region12: #{d_topo_projector.1} parent=5 // pred_fallthru
        _
      %p170 = scmp.lt.s32.totalorder %s13, 2
      // Predicated region
      $region25: #{d_topo_projector.1} parent=5 // pred_check
        %p171 = pneg %p170
      $region26: #{d_topo_projector.1} parent=5 // pred_check_branch
        %173 = sbr.rel (%p171) target = $region28
      $region27: #{d_topo_projector.1} parent=5 // pred_region
        // Predicated region
        $region29: #{d_topo_projector.1} parent=27 // pred_check
          %p174 = pneg %p49
        $region30: #{d_topo_projector.1} parent=27 // pred_check_branch
          %176 = sbr.rel (%p174) target = $region32
        $region31: #{d_topo_projector.1} parent=27 // pred_region
          %s177 = ssub.s32 1, %s20
          %s178 = smul.u32 %s21, %s177
          %p179 = scmp.lt.s32.totalorder %s178, 0
          %s180 = scalar_select %p179, %s178, 0
          %s181 = smul.addr %s180, 8
          %s182 = scalar_lea.vmem %s0, %s181
          %s183 = ssub.s32 1, %s20
          %s184 = smul.u32 %s21, %s183
        $region32: #{d_topo_projector.1} parent=27 // pred_fallthru
          _
      $region28: #{d_topo_projector.1} parent=5 // pred_fallthru
        _
      %p185 = scmp.le.s32.totalorder 1, %s13
      %p186 = scmp.lt.s32.totalorder %s13, 3
      %p187 = pnand %p185, %p186
      %p188 = pneg %p187
      // Predicated region
      $region33: #{d_topo_projector.1} parent=5 // pred_check
        _
      $region34: #{d_topo_projector.1} parent=5 // pred_check_branch
        %190 = sbr.rel (%p187) target = $region36
      $region35: #{d_topo_projector.1} parent=5 // pred_region
        %s191 = ssub.s32 %s13, 1
        %s192 = ssub.s32 1, %s22
        %s193 = smul.u32 %s23, %s192
        %p194 = scmp.lt.s32.totalorder %s193, 0
        %s195 = scalar_select %p194, %s193, 0
        %s196 = smul.addr %s195, 8
        %s197 = scalar_lea.vmem %s0, %s196
        %p198 = pneg %p55
        %p199 = pneg %p52
        %p200 = pneg %p76
        %p201 = pneg %p73
        %p202 = pneg %p97
        %p203 = pneg %p94
        %p204 = pneg %p118
        %p205 = pneg %p115
        %p206 = pneg %p146
        %p207 = pneg %p143
        %s208 = sand.u32 %s133, 1
        %s209 = scalar_lea.sflag [#allocation6], %s208
        %s210 = sand.u32 %s133, 1
        %s211 = smul.addr %s210, 8
        %s212 = scalar_lea.vmem [#allocation5], %s211
        %s213 = ssub.s32 1, %s22
        %s214 = smul.u32 %s23, %s213
        %p215 = scmp.lt.s32.totalorder %s214, 0
        %s216 = scalar_select %p215, %s214, 0
        %s217 = smul.addr %s216, 8
        %s218 = scalar_lea.vmem %s0, %s217
        %s219 = ssub.s32 1, %s22
        %s220 = smul.u32 %s23, %s219
        %s221 = smul.u32 %s23, %s22
        %p223 = scmp.eq.s32.totalorder %s22, 0
        // Predicated region
        $region37: #{d_topo_projector.1} parent=35 // pred_check
          %p224 = pneg %p223
        $region38: #{d_topo_projector.1} parent=35 // pred_check_branch
          %226 = sbr.rel (%p224) target = $region40
        $region39: #{d_topo_projector.1} parent=35 // pred_region
          %p227 = scmp.eq.s32.totalorder %s23, 0
          // Predicated region
          $region41: #{d_topo_projector.1} parent=39 // pred_check
            %p228 = pneg %p227
          $region42: #{d_topo_projector.1} parent=39 // pred_check_branch
            %230 = sbr.rel (%p228) target = $region44
          $region43: #{d_topo_projector.1} parent=39 // pred_region
            %vm231 = vcmask 253952
            %232 = vst.msk [vmem:[#allocation2] sm:$0x1] %vm231, 0.0
            %233 = vst.msk [vmem:[#allocation3] sm:$0x1] %vm231, 0.0
          $region44: #{d_topo_projector.1} parent=39 // pred_fallthru
            _
          %v234 = vld [vmem:[%s218] sm:$0xff]
          %v235 = vpack.c.bf16 %v234, %v234
          %v236 = vld [vmem:[%s1] sm:$0xf]
          %v237 = vld [vmem:[%s1 + $0x4] sm:$0xf]
          %v238 = vld [vmem:[%s1 + $0x8] sm:$0xf]
          %v239 = vld [vmem:[%s1 + $0xc] sm:$0xf]
          %v240 = vld [vmem:[%s1 + $0x10] sm:$0xf]
          %v241 = vld [vmem:[%s1 + $0x14] sm:$0xf]
          %v242 = vld [vmem:[%s1 + $0x18] sm:$0xf]
          %v243 = vld [vmem:[%s1 + $0x1c] sm:$0xf]
          %v252 = vunpack.c.l.b16 %v236
          %v253 = vunpack.c.l.b16 %v237
          %v254 = vunpack.c.l.b16 %v238
          %v255 = vunpack.c.l.b16 %v239
          %v256 = vunpack.c.l.b16 %v240
          %v257 = vunpack.c.l.b16 %v241
          %v258 = vunpack.c.l.b16 %v242
          %v259 = vunpack.c.l.b16 %v243
          %v260 = vpack.c.b16 %v253, %v252
          %v261 = vpack.c.b16 %v255, %v254
          %v262 = vpack.c.b16 %v257, %v256
          %v263 = vpack.c.b16 %v259, %v258
          %vm268 = vcmask 523264
          %v270 = vsel %vm268, %v235, 0
          %272 = vmatprep.subr.bf16.mxu0 0
          %273 = vmatpush1.bf16.msra.mxu0 %v260
          %274 = vmatprep.subr.bf16.mxu0 0
          %275 = vmatpush1.bf16.msra.mxu0 %v261
          %276 = vmatprep.subr.bf16.mxu0 0
          %277 = vmatpush1.bf16.msra.mxu0 %v262
          %278 = vmatprep.subr.bf16.mxu0 0
          %279 = vmatpush1.bf16.msra.mxu0 %v263
          %280 = vmatprep.subr.bf16.mxu0 0
          %281 = vmatpush1.bf16.msra.mxu0 0
          %282 = vmatprep.subr.bf16.mxu0 0
          %283 = vmatpush1.bf16.msra.mxu0 0
          %284 = vmatprep.subr.bf16.mxu0 0
          %285 = vmatpush1.bf16.msra.mxu0 0
          %286 = vmatprep.subr.bf16.mxu0 0
          %287 = vmatpush1.bf16.msra.mxu0 0
          %288 = vmatprep.subr.bf16.mxu0 0
          %289 = vmatpush1.bf16.msra.mxu0 0
          %290 = vmatprep.subr.bf16.mxu0 0
          %291 = vmatpush1.bf16.msra.mxu0 0
          %292 = vmatprep.subr.bf16.mxu0 0
          %293 = vmatpush1.bf16.msra.mxu0 0
          %294 = vmatprep.subr.bf16.mxu0 0
          %295 = vmatpush1.bf16.msra.mxu0 0
          %296 = vmatprep.subr.bf16.mxu0 0
          %297 = vmatpush1.bf16.msra.mxu0 0
          %298 = vmatprep.subr.bf16.mxu0 0
          %299 = vmatpush1.bf16.msra.mxu0 0
          %300 = vmatprep.subr.bf16.mxu0 0
          %301 = vmatpush1.bf16.msra.mxu0 0
          %302 = vmatprep.subr.bf16.mxu0 0
          %303 = vmatpush1.bf16.msra.mxu0 0
          %304 = vmatprep.mubr.bf16.mxu0 0
          %305 = vmatmul.mubr.bf16.gmra.mrb[0].mxu0 %v270
          %v306 = vpop.f32.mrb[0].mxu0
          %v307 = vadd.f32 0.0, %v306
          %v308 = vpop.f32.mrb[0].mxu0
          %v309 = vpop.f32.mrb[0].mxu0
          %v310 = vpop.f32.mrb[0].mxu0
          %311 = vdwg.mxu0
          %s312 = smul.u32 %s23, 8
          %s313 = scalar_lea.vmem [#allocation4], %s312
          %vm314 = vcmask 261120
          %315 = vst.msk [vmem:[%s313] sm:$0xff] %vm314, %v307
          %v316 = vld [vmem:[#allocation2] sm:$0x1]
          %v317 = vsel %vm314, %v307, 0.0
          %v318 = vrot.slane %v317, 4
          %v319 = vadd.f32 %v317, %v318
          %v320 = vrot.slane %v319, 2
          %v321 = vadd.f32 %v319, %v320
          %v322 = vrot.slane %v321, 1
          %v323 = vadd.f32 %v321, %v322
          %v324 = vadd.f32 %v316, %v323
          %vm325 = vcmask 253952
          %326 = vst.msk [vmem:[#allocation2] sm:$0x1] %vm325, %v324
          %v327 = vld [vmem:[#allocation3] sm:$0x1]
          %v328 = vmul.f32 %v307, %v307
          %v329 = vsel %vm314, %v328, 0.0
          %v330 = vrot.slane %v329, 4
          %v331 = vadd.f32 %v329, %v330
          %v332 = vrot.slane %v331, 2
          %v333 = vadd.f32 %v331, %v332
          %v334 = vrot.slane %v333, 1
          %v335 = vadd.f32 %v333, %v334
          %v336 = vadd.f32 %v327, %v335
          %337 = vst.msk [vmem:[#allocation3] sm:$0x1] %vm325, %v336
        $region40: #{d_topo_projector.1} parent=35 // pred_fallthru
          _
        %p338 = scmp.eq.s32.totalorder %s22, 1
        // Predicated region
        $region45: #{d_topo_projector.1} parent=35 // pred_check
          %p339 = pneg %p338
        $region46: #{d_topo_projector.1} parent=35 // pred_check_branch
          %341 = sbr.rel (%p339) target = $region48
        $region47: #{d_topo_projector.1} parent=35 // pred_region
          %v342 = vld [vmem:[#allocation2] sm:$0x1]
          %v343 = vmul.f32 %v342, 0.125
          %v344 = vld [vmem:[#allocation3] sm:$0x1]
          %v345 = vmul.f32 %v344, 0.125
          %v346 = vmul.f32 %v343, %v343
          %v347 = vsub.f32 %v345, %v346
          %v348 = vmax.f32 %v347, 0.0
          %v349 = vld [vmem:[%s2] sm:$0x1]
          %v350 = vadd.f32 %v348, 1e-05
          %v351 = vrsqrt.pop %v350
          %v352 = vmul.f32 %v349, %v351
          %v353 = vld [vmem:[%s3] sm:$0x1]
          %v354 = vmul.f32 %v343, %v352
          %v355 = vsub.f32 %v353, %v354
          %s356 = smul.u32 %s23, 8
          %s357 = scalar_lea.vmem [#allocation4], %s356
          %v358 = vld [vmem:[%s357] sm:$0xff]
          %v360 = vlaneseq
          %v361 = vshrl.u32 %v360, 7
          %v362 = vsub.s32 0, %v361
          %v363 = vrot.slane %v352, %v362
          %v365 = vmul.f32 %v358, %v363
          %v367 = vlaneseq
          %v368 = vshrl.u32 %v367, 7
          %v369 = vsub.s32 0, %v368
          %v370 = vrot.slane %v355, %v369
          %v372 = vadd.f32 %v365, %v370
          %v373 = vmax.f32 %v372, 0.0
          %vm374 = vcmask 261120
          %375 = vst.msk [vmem:[%s212] sm:$0xff] %vm374, %v373
        $region48: #{d_topo_projector.1} parent=35 // pred_fallthru
          _
        %s376 = sand.u32 %s133, 1
        %s377 = scalar_lea.sflag [#allocation6], %s376
        %s378 = sand.u32 %s133, 1
        %s379 = smul.addr %s378, 8
        %s380 = scalar_lea.vmem [#allocation5], %s379
        // Predicated region
        $region49: #{d_topo_projector.1} parent=35 // pred_check
          %p381 = pneg %p143
        $region50: #{d_topo_projector.1} parent=35 // pred_check_branch
          %383 = sbr.rel (%p381) target = $region52
        $region51: #{d_topo_projector.1} parent=35 // pred_region
          %s384 = smul.u32 %s23, %s22
          %s386 = ssub.s32 128, 128
          %387 = vsyncadd %s377, %s386
          %s388 = smul.addr %s384, 128
          %s389 = scalar_lea.hbm %s4, %s388
          %s391 = sshll.u32 %s380, 4
          %s392 = int_to_ptr.vmem [resolvable:$true] %s391
          %394 = dma.vmem_to_hbm [thread:$0]  %s392, 128, %s389, %s377
        $region52: #{d_topo_projector.1} parent=35 // pred_fallthru
          _
      $region36: #{d_topo_projector.1} parent=5 // pred_fallthru
        _
      %p395 = scmp.le.s32.totalorder 2, %s13
      // Predicated region
      $region53: #{d_topo_projector.1} parent=5 // pred_check
        %p396 = pneg %p395
      $region54: #{d_topo_projector.1} parent=5 // pred_check_branch
        %398 = sbr.rel (%p396) target = $region56
      $region55: #{d_topo_projector.1} parent=5 // pred_region
        %s399 = ssub.s32 %s13, 2
        // Predicated region
        $region57: #{d_topo_projector.1} parent=55 // pred_check
          %p400 = pneg %p149
        $region58: #{d_topo_projector.1} parent=55 // pred_check_branch
          %402 = sbr.rel (%p400) target = $region60
        $region59: #{d_topo_projector.1} parent=55 // pred_region
          %s403 = sand.u32 %s134, 1
          %s404 = scalar_lea.sflag [#allocation6], %s403
          %s405 = sand.u32 %s134, 1
          %s406 = smul.addr %s405, 8
          %s407 = scalar_lea.vmem [#allocation5], %s406
          %408 = dma.done %s404, 128
        $region60: #{d_topo_projector.1} parent=55 // pred_fallthru
          _
      $region56: #{d_topo_projector.1} parent=5 // pred_fallthru
        _
    $region6: #{d_topo_projector.1} parent=1 // loop_footer
      %s17 = sadd.s32 1, %s13
    $region7: #{d_topo_projector.1} parent=1 // loop_footer_branch
      %12 = sbr.rel target = $region3
    $region8: #{d_topo_projector.1} parent=1 // loop_exit
      _
    %409 = vsyncpa [#allocation6], 1
    %s410 = scalar_lea.sflag [#allocation6], 1
    %411 = vsyncpa %s410, 1

</llo_original>
